<compile_context>
chip_gen: v7x
topology: tpu7x:2x2x1
jax: 0.10.0
libtpu: 0.0.40
codegen_flags: <defaults>
</compile_context>

<pallas_src>
import functools

import jax
import jax.numpy as jnp
from jax.experimental import pallas as pl
from jax.experimental.pallas import tpu as pltpu

# Squeezed leading block dim (size-1, removed from the kernel view).
_SQUEEZED = pl.Squeezed() if hasattr(pl, "Squeezed") else None


def _round_up(x, m):
    return (x + m - 1) // m * m


def _vmem_limit_bytes(per_step_bytes):
    # 2x headroom for compiler-internal scratch; stay under v7x's 64 MiB/TC.
    return int(min(max(2 * per_step_bytes, 32 * 1024 * 1024),
                   60 * 1024 * 1024))


def _combine_kernel(*refs, C, E, n_out):
    """Weighted channel sum for one (blk, blk) tile: out[o][c] = sum_e w[o][c,e]*A[e]."""
    w_refs = refs[:n_out]          # each (C, E) f32 in SMEM
    A_ref = refs[n_out]            # (E, blk, blk) f32 in VMEM
    out_refs = refs[n_out + 1:]    # each (C, blk, blk) bf16 in VMEM
    for c in range(C):             # C, E small & static -> fully unrolled (VPU)
        accs = [w_refs[o][c, 0] * A_ref[0] for o in range(n_out)]
        for e in range(1, E):
            a_e = A_ref[e]
            for o in range(n_out):
                accs[o] = accs[o] + w_refs[o][c, e] * a_e
        for o in range(n_out):
            out_refs[o][c] = accs[o].astype(out_refs[o].dtype)


def _gt_conv(sw_list, A_pad, blk):
    """Pallas stage 1: out[o] = einsum('ce,enm->cnm', sw_list[o], A_pad) in bf16."""
    E, Np, _ = A_pad.shape
    C = sw_list[0].shape[0]
    n_out = len(sw_list)
    g = Np // blk

    smem_spec = pl.BlockSpec(memory_space=pltpu.MemorySpace.SMEM)
    A_spec = pl.BlockSpec((E, blk, blk), lambda i, j: (0, i, j))
    out_spec = pl.BlockSpec((C, blk, blk), lambda i, j: (0, i, j))
    out_shape = jax.ShapeDtypeStruct((C, Np, Np), jnp.bfloat16)

    # Per-step VMEM: double-buffered f32 A tile + double-buffered bf16 outputs.
    per_step = 2 * E * blk * blk * 4 + n_out * 2 * C * blk * blk * 2

    outs = pl.pallas_call(
        functools.partial(_combine_kernel, C=C, E=E, n_out=n_out),
        out_shape=tuple([out_shape] * n_out) if n_out > 1 else out_shape,
        grid=(g, g),
        in_specs=[smem_spec] * n_out + [A_spec],
        out_specs=tuple([out_spec] * n_out) if n_out > 1 else out_spec,
        compiler_params=pltpu.CompilerParams(
            dimension_semantics=("parallel", "parallel"),
            vmem_limit_bytes=_vmem_limit_bytes(per_step)),
    )(*sw_list, A_pad)
    return outs if n_out > 1 else (outs,)


def _bmm_kernel(lhs_ref, rhs_ref, o_ref, acc_ref):
    """One (blk, blk) tile of H[c] = lhs[c] @ rhs[c]; k (axis 3) is the reduction."""
    @pl.when(pl.program_id(3) == 0)
    def _():
        acc_ref[...] = jnp.zeros_like(acc_ref)

    acc_ref[...] += jnp.dot(lhs_ref[...], rhs_ref[...],
                            preferred_element_type=jnp.float32)

    @pl.when(pl.program_id(3) == pl.num_programs(3) - 1)
    def _():
        o_ref[...] = acc_ref[...].astype(o_ref.dtype)


def _gt_bmm(lhs, rhs, blk):
    """Pallas stage 2: H[c] = lhs[c] @ rhs[c] (bf16 operands, f32 output)."""
    C, Np, _ = lhs.shape
    g = Np // blk

    lhs_spec = pl.BlockSpec((_SQUEEZED, blk, blk), lambda c, i, j, k: (c, i, k))
    rhs_spec = pl.BlockSpec((_SQUEEZED, blk, blk), lambda c, i, j, k: (c, k, j))
    out_spec = pl.BlockSpec((_SQUEEZED, blk, blk), lambda c, i, j, k: (c, i, j))

    # Per-step VMEM: 2x double-buffered bf16 operand tiles + double-buffered
    # f32 output tile + f32 accumulator scratch.
    per_step = 2 * 2 * blk * blk * 2 + 2 * blk * blk * 4 + blk * blk * 4

    return pl.pallas_call(
        _bmm_kernel,
        out_shape=jax.ShapeDtypeStruct((C, Np, Np), jnp.float32),
        grid=(C, g, g, g),
        in_specs=[lhs_spec, rhs_spec],
        out_specs=out_spec,
        scratch_shapes=[pltpu.VMEM((blk, blk), jnp.float32)],
        compiler_params=pltpu.CompilerParams(
            dimension_semantics=("parallel", "parallel", "parallel",
                                 "arbitrary"),
            vmem_limit_bytes=_vmem_limit_bytes(per_step)),
    )(lhs, rhs)


def gt_layer(A, w1, w2=None, H_prev=None, first=True):
    """JAX/Pallas equivalent of GTLayer.forward.

    A:      (1, E, N, N) float32
    w1, w2: (C, E, 1, 1) float32 (GTConv weights)
    H_prev: (C, N, N) float32, only used when first=False
    returns (H, W): H (C, N, N) f32, W = list of softmaxed weights (C, E, 1, 1)
    """
    A3 = A[0].astype(jnp.float32)       # (E, N, N)
    E, N, _ = A3.shape
    C = w1.shape[0]

    # Softmax over in_channels (torch dim=1) -- tiny (C, E), XLA glue.
    sw1 = jax.nn.softmax(w1[:, :, 0, 0].astype(jnp.float32), axis=1)  # (C, E)
    sw_list = [sw1]
    if first:
        sw2 = jax.nn.softmax(w2[:, :, 0, 0].astype(jnp.float32), axis=1)
        sw_list.append(sw2)

    # Lane-dense, MXU-sized tiles; zero-pad N (exact for sum + matmul).
    blk = 128 if N <= 128 else 256
    Np = _round_up(N, blk)
    pad = Np - N
    A_pad = jnp.pad(A3, ((0, 0), (0, pad), (0, pad))) if pad else A3

    conv_outs = _gt_conv(sw_list, A_pad, blk)   # bf16 (C, Np, Np) each

    if first:
        a_pad, b_pad = conv_outs
        H_pad = _gt_bmm(a_pad, b_pad, blk)
    else:
        (a_pad,) = conv_outs
        Hp = H_prev.astype(jnp.float32)
        if pad:
            Hp = jnp.pad(Hp, ((0, 0), (0, pad), (0, pad)))
        H_pad = _gt_bmm(Hp.astype(jnp.bfloat16), a_pad, blk)

    H = H_pad[:, :N, :N] if pad else H_pad
    W = [sw[:, :, None, None] for sw in sw_list]
    return H, W


def _reference(A, w1, w2=None, H_prev=None, first=True):
    """Pure-JAX f32 reference of GTLayer.forward for correctness checks."""
    sw1 = jax.nn.softmax(w1[:, :, 0, 0], axis=1)
    a = jnp.einsum("ce,enm->cnm", sw1, A[0])
    if first:
        sw2 = jax.nn.softmax(w2[:, :, 0, 0], axis=1)
        b = jnp.einsum("ce,enm->cnm", sw2, A[0])
        return jnp.einsum("cij,cjk->cik", a, b)
    return jnp.einsum("cij,cjk->cik", H_prev, a)


if __name__ == "__main__":
    # Small shapes consistent with the module:
    # in_channels (edge types) E=4, out_channels C=2, N=16 nodes.
    E, C, N = 4, 2, 16

    key = jax.random.PRNGKey(0)
    kA, kw1, kw2, kh = jax.random.split(key, 4)

    A = jax.random.uniform(kA, (1, E, N, N), dtype=jnp.float32)
    # GTConv.reset_parameters uses constant 0.1; use deterministic random
    # weights instead so the softmax is non-trivial (synthetic init).
    w1 = 0.1 + 0.05 * jax.random.normal(kw1, (C, E, 1, 1), dtype=jnp.float32)
    w2 = 0.1 + 0.05 * jax.random.normal(kw2, (C, E, 1, 1), dtype=jnp.float32)
    H_prev = jax.random.uniform(kh, (C, N, N), dtype=jnp.float32)

    # bf16 MXU operands -> compare against the f32 reference with ~1% tolerance.
    RTOL, ATOL = 2e-2, 1e-2

    # first=True path: H = bmm(conv1(A), conv2(A))
    H, W = gt_layer(A, w1, w2, first=True)
    jax.block_until_ready(H)
    H_ref = _reference(A, w1, w2, first=True)
    assert H.shape == (C, N, N)
    assert jnp.allclose(H, H_ref, rtol=RTOL, atol=ATOL), "first=True mismatch"
    assert len(W) == 2 and W[0].shape == (C, E, 1, 1)

    # first=False path: H = bmm(H_prev, conv1(A))
    H2, W2 = gt_layer(A, w1, H_prev=H_prev, first=False)
    jax.block_until_ready(H2)
    H2_ref = _reference(A, w1, H_prev=H_prev, first=False)
    assert H2.shape == (C, N, N)
    assert jnp.allclose(H2, H2_ref, rtol=RTOL, atol=ATOL), "first=False mismatch"
    assert len(W2) == 1

    print("KERNEL_OK")
</pallas_src>

<mosaic_0001>
module attributes {stable_mosaic.version = 11 : i64} {
  func.func @_combine_kernel(%arg0: i32, %arg1: i32, %arg2: memref<2x4xf32, #tpu.memory_space<smem>>, %arg3: memref<2x4xf32, #tpu.memory_space<smem>>, %arg4: memref<4x128x128xf32, #tpu.memory_space<vmem>>, %arg5: memref<2x128x128xbf16, #tpu.memory_space<vmem>>, %arg6: memref<2x128x128xbf16, #tpu.memory_space<vmem>>) attributes {dimension_semantics = [#tpu.dimension_semantics<parallel>, #tpu.dimension_semantics<parallel>], iteration_bounds = array<i64: 1, 1>, scalar_prefetch = 0 : i64, scratch_operands = 0 : i64, tpu.core_type = #tpu.core_type<tc>, window_params = [{transform_indices = @transform_0, window_bounds = array<i64: 2, 4>}, {transform_indices = @transform_1, window_bounds = array<i64: 2, 4>}, {transform_indices = @transform_2, window_bounds = array<i64: 4, 128, 128>}, {transform_indices = @transform_3, window_bounds = array<i64: 2, 128, 128>}, {transform_indices = @transform_4, window_bounds = array<i64: 2, 128, 128>}]} {
    %c0 = arith.constant 0 : index
    %c0_0 = arith.constant 0 : index
    %0 = memref.load %arg2[%c0, %c0_0] : memref<2x4xf32, #tpu.memory_space<smem>>
    %c0_1 = arith.constant 0 : index
    %c0_2 = arith.constant 0 : index
    %c0_3 = arith.constant 0 : index
    %1 = vector.load %arg4[%c0_1, %c0_2, %c0_3] : memref<4x128x128xf32, #tpu.memory_space<vmem>>, vector<1x128x128xf32>
    %2 = vector.shape_cast %1 : vector<1x128x128xf32> to vector<128x128xf32>
    %3 = vector.broadcast %0 : f32 to vector<128x128xf32>
    %4 = arith.mulf %3, %2 : vector<128x128xf32>
    %c0_4 = arith.constant 0 : index
    %c0_5 = arith.constant 0 : index
    %5 = memref.load %arg3[%c0_4, %c0_5] : memref<2x4xf32, #tpu.memory_space<smem>>
    %c0_6 = arith.constant 0 : index
    %c0_7 = arith.constant 0 : index
    %c0_8 = arith.constant 0 : index
    %6 = vector.load %arg4[%c0_6, %c0_7, %c0_8] : memref<4x128x128xf32, #tpu.memory_space<vmem>>, vector<1x128x128xf32>
    %7 = vector.shape_cast %6 : vector<1x128x128xf32> to vector<128x128xf32>
    %8 = vector.broadcast %5 : f32 to vector<128x128xf32>
    %9 = arith.mulf %8, %7 : vector<128x128xf32>
    %c1 = arith.constant 1 : index
    %c0_9 = arith.constant 0 : index
    %c0_10 = arith.constant 0 : index
    %10 = vector.load %arg4[%c1, %c0_9, %c0_10] : memref<4x128x128xf32, #tpu.memory_space<vmem>>, vector<1x128x128xf32>
    %11 = vector.shape_cast %10 : vector<1x128x128xf32> to vector<128x128xf32>
    %c0_11 = arith.constant 0 : index
    %c1_12 = arith.constant 1 : index
    %12 = memref.load %arg2[%c0_11, %c1_12] : memref<2x4xf32, #tpu.memory_space<smem>>
    %13 = vector.broadcast %12 : f32 to vector<128x128xf32>
    %14 = arith.mulf %13, %11 : vector<128x128xf32>
    %15 = arith.addf %4, %14 : vector<128x128xf32>
    %c0_13 = arith.constant 0 : index
    %c1_14 = arith.constant 1 : index
    %16 = memref.load %arg3[%c0_13, %c1_14] : memref<2x4xf32, #tpu.memory_space<smem>>
    %17 = vector.broadcast %16 : f32 to vector<128x128xf32>
    %18 = arith.mulf %17, %11 : vector<128x128xf32>
    %19 = arith.addf %9, %18 : vector<128x128xf32>
    %c2 = arith.constant 2 : index
    %c0_15 = arith.constant 0 : index
    %c0_16 = arith.constant 0 : index
    %20 = vector.load %arg4[%c2, %c0_15, %c0_16] : memref<4x128x128xf32, #tpu.memory_space<vmem>>, vector<1x128x128xf32>
    %21 = vector.shape_cast %20 : vector<1x128x128xf32> to vector<128x128xf32>
    %c0_17 = arith.constant 0 : index
    %c2_18 = arith.constant 2 : index
    %22 = memref.load %arg2[%c0_17, %c2_18] : memref<2x4xf32, #tpu.memory_space<smem>>
    %23 = vector.broadcast %22 : f32 to vector<128x128xf32>
    %24 = arith.mulf %23, %21 : vector<128x128xf32>
    %25 = arith.addf %15, %24 : vector<128x128xf32>
    %c0_19 = arith.constant 0 : index
    %c2_20 = arith.constant 2 : index
    %26 = memref.load %arg3[%c0_19, %c2_20] : memref<2x4xf32, #tpu.memory_space<smem>>
    %27 = vector.broadcast %26 : f32 to vector<128x128xf32>
    %28 = arith.mulf %27, %21 : vector<128x128xf32>
    %29 = arith.addf %19, %28 : vector<128x128xf32>
    %c3 = arith.constant 3 : index
    %c0_21 = arith.constant 0 : index
    %c0_22 = arith.constant 0 : index
    %30 = vector.load %arg4[%c3, %c0_21, %c0_22] : memref<4x128x128xf32, #tpu.memory_space<vmem>>, vector<1x128x128xf32>
    %31 = vector.shape_cast %30 : vector<1x128x128xf32> to vector<128x128xf32>
    %c0_23 = arith.constant 0 : index
    %c3_24 = arith.constant 3 : index
    %32 = memref.load %arg2[%c0_23, %c3_24] : memref<2x4xf32, #tpu.memory_space<smem>>
    %33 = vector.broadcast %32 : f32 to vector<128x128xf32>
    %34 = arith.mulf %33, %31 : vector<128x128xf32>
    %35 = arith.addf %25, %34 : vector<128x128xf32>
    %c0_25 = arith.constant 0 : index
    %c3_26 = arith.constant 3 : index
    %36 = memref.load %arg3[%c0_25, %c3_26] : memref<2x4xf32, #tpu.memory_space<smem>>
    %37 = vector.broadcast %36 : f32 to vector<128x128xf32>
    %38 = arith.mulf %37, %31 : vector<128x128xf32>
    %39 = arith.addf %29, %38 : vector<128x128xf32>
    %40 = arith.truncf %35 : vector<128x128xf32> to vector<128x128xbf16>
    %c0_27 = arith.constant 0 : index
    %c0_28 = arith.constant 0 : index
    %c0_29 = arith.constant 0 : index
    %41 = vector.load %arg5[%c0_27, %c0_28, %c0_29] : memref<2x128x128xbf16, #tpu.memory_space<vmem>>, vector<1x128x128xbf16>
    %42 = vector.shape_cast %41 : vector<1x128x128xbf16> to vector<128x128xbf16>
    %43 = vector.shape_cast %40 : vector<128x128xbf16> to vector<1x128x128xbf16>
    tpu.vector_store %arg5[%c0_27, %c0_28, %c0_29], %43 {strides = array<i32>} : memref<2x128x128xbf16, #tpu.memory_space<vmem>>, vector<1x128x128xbf16>,
    %44 = arith.truncf %39 : vector<128x128xf32> to vector<128x128xbf16>
    %c0_30 = arith.constant 0 : index
    %c0_31 = arith.constant 0 : index
    %c0_32 = arith.constant 0 : index
    %45 = vector.load %arg6[%c0_30, %c0_31, %c0_32] : memref<2x128x128xbf16, #tpu.memory_space<vmem>>, vector<1x128x128xbf16>
    %46 = vector.shape_cast %45 : vector<1x128x128xbf16> to vector<128x128xbf16>
    %47 = vector.shape_cast %44 : vector<128x128xbf16> to vector<1x128x128xbf16>
    tpu.vector_store %arg6[%c0_30, %c0_31, %c0_32], %47 {strides = array<i32>} : memref<2x128x128xbf16, #tpu.memory_space<vmem>>, vector<1x128x128xbf16>,
    %c1_33 = arith.constant 1 : index
    %c0_34 = arith.constant 0 : index
    %48 = memref.load %arg2[%c1_33, %c0_34] : memref<2x4xf32, #tpu.memory_space<smem>>
    %c0_35 = arith.constant 0 : index
    %c0_36 = arith.constant 0 : index
    %c0_37 = arith.constant 0 : index
    %49 = vector.load %arg4[%c0_35, %c0_36, %c0_37] : memref<4x128x128xf32, #tpu.memory_space<vmem>>, vector<1x128x128xf32>
    %50 = vector.shape_cast %49 : vector<1x128x128xf32> to vector<128x128xf32>
    %51 = vector.broadcast %48 : f32 to vector<128x128xf32>
    %52 = arith.mulf %51, %50 : vector<128x128xf32>
    %c1_38 = arith.constant 1 : index
    %c0_39 = arith.constant 0 : index
    %53 = memref.load %arg3[%c1_38, %c0_39] : memref<2x4xf32, #tpu.memory_space<smem>>
    %c0_40 = arith.constant 0 : index
    %c0_41 = arith.constant 0 : index
    %c0_42 = arith.constant 0 : index
    %54 = vector.load %arg4[%c0_40, %c0_41, %c0_42] : memref<4x128x128xf32, #tpu.memory_space<vmem>>, vector<1x128x128xf32>
    %55 = vector.shape_cast %54 : vector<1x128x128xf32> to vector<128x128xf32>
    %56 = vector.broadcast %53 : f32 to vector<128x128xf32>
    %57 = arith.mulf %56, %55 : vector<128x128xf32>
    %c1_43 = arith.constant 1 : index
    %c0_44 = arith.constant 0 : index
    %c0_45 = arith.constant 0 : index
    %58 = vector.load %arg4[%c1_43, %c0_44, %c0_45] : memref<4x128x128xf32, #tpu.memory_space<vmem>>, vector<1x128x128xf32>
    %59 = vector.shape_cast %58 : vector<1x128x128xf32> to vector<128x128xf32>
    %c1_46 = arith.constant 1 : index
    %c1_47 = arith.constant 1 : index
    %60 = memref.load %arg2[%c1_46, %c1_47] : memref<2x4xf32, #tpu.memory_space<smem>>
    %61 = vector.broadcast %60 : f32 to vector<128x128xf32>
    %62 = arith.mulf %61, %59 : vector<128x128xf32>
    %63 = arith.addf %52, %62 : vector<128x128xf32>
    %c1_48 = arith.constant 1 : index
    %c1_49 = arith.constant 1 : index
    %64 = memref.load %arg3[%c1_48, %c1_49] : memref<2x4xf32, #tpu.memory_space<smem>>
    %65 = vector.broadcast %64 : f32 to vector<128x128xf32>
    %66 = arith.mulf %65, %59 : vector<128x128xf32>
    %67 = arith.addf %57, %66 : vector<128x128xf32>
    %c2_50 = arith.constant 2 : index
    %c0_51 = arith.constant 0 : index
    %c0_52 = arith.constant 0 : index
    %68 = vector.load %arg4[%c2_50, %c0_51, %c0_52] : memref<4x128x128xf32, #tpu.memory_space<vmem>>, vector<1x128x128xf32>
    %69 = vector.shape_cast %68 : vector<1x128x128xf32> to vector<128x128xf32>
    %c1_53 = arith.constant 1 : index
    %c2_54 = arith.constant 2 : index
    %70 = memref.load %arg2[%c1_53, %c2_54] : memref<2x4xf32, #tpu.memory_space<smem>>
    %71 = vector.broadcast %70 : f32 to vector<128x128xf32>
    %72 = arith.mulf %71, %69 : vector<128x128xf32>
    %73 = arith.addf %63, %72 : vector<128x128xf32>
    %c1_55 = arith.constant 1 : index
    %c2_56 = arith.constant 2 : index
    %74 = memref.load %arg3[%c1_55, %c2_56] : memref<2x4xf32, #tpu.memory_space<smem>>
    %75 = vector.broadcast %74 : f32 to vector<128x128xf32>
    %76 = arith.mulf %75, %69 : vector<128x128xf32>
    %77 = arith.addf %67, %76 : vector<128x128xf32>
    %c3_57 = arith.constant 3 : index
    %c0_58 = arith.constant 0 : index
    %c0_59 = arith.constant 0 : index
    %78 = vector.load %arg4[%c3_57, %c0_58, %c0_59] : memref<4x128x128xf32, #tpu.memory_space<vmem>>, vector<1x128x128xf32>
    %79 = vector.shape_cast %78 : vector<1x128x128xf32> to vector<128x128xf32>
    %c1_60 = arith.constant 1 : index
    %c3_61 = arith.constant 3 : index
    %80 = memref.load %arg2[%c1_60, %c3_61] : memref<2x4xf32, #tpu.memory_space<smem>>
    %81 = vector.broadcast %80 : f32 to vector<128x128xf32>
    %82 = arith.mulf %81, %79 : vector<128x128xf32>
    %83 = arith.addf %73, %82 : vector<128x128xf32>
    %c1_62 = arith.constant 1 : index
    %c3_63 = arith.constant 3 : index
    %84 = memref.load %arg3[%c1_62, %c3_63] : memref<2x4xf32, #tpu.memory_space<smem>>
    %85 = vector.broadcast %84 : f32 to vector<128x128xf32>
    %86 = arith.mulf %85, %79 : vector<128x128xf32>
    %87 = arith.addf %77, %86 : vector<128x128xf32>
    %88 = arith.truncf %83 : vector<128x128xf32> to vector<128x128xbf16>
    %c1_64 = arith.constant 1 : index
    %c0_65 = arith.constant 0 : index
    %c0_66 = arith.constant 0 : index
    %89 = vector.load %arg5[%c1_64, %c0_65, %c0_66] : memref<2x128x128xbf16, #tpu.memory_space<vmem>>, vector<1x128x128xbf16>
    %90 = vector.shape_cast %89 : vector<1x128x128xbf16> to vector<128x128xbf16>
    %91 = vector.shape_cast %88 : vector<128x128xbf16> to vector<1x128x128xbf16>
    tpu.vector_store %arg5[%c1_64, %c0_65, %c0_66], %91 {strides = array<i32>} : memref<2x128x128xbf16, #tpu.memory_space<vmem>>, vector<1x128x128xbf16>,
    %92 = arith.truncf %87 : vector<128x128xf32> to vector<128x128xbf16>
    %c1_67 = arith.constant 1 : index
    %c0_68 = arith.constant 0 : index
    %c0_69 = arith.constant 0 : index
    %93 = vector.load %arg6[%c1_67, %c0_68, %c0_69] : memref<2x128x128xbf16, #tpu.memory_space<vmem>>, vector<1x128x128xbf16>
    %94 = vector.shape_cast %93 : vector<1x128x128xbf16> to vector<128x128xbf16>
    %95 = vector.shape_cast %92 : vector<128x128xbf16> to vector<1x128x128xbf16>
    tpu.vector_store %arg6[%c1_67, %c0_68, %c0_69], %95 {strides = array<i32>} : memref<2x128x128xbf16, #tpu.memory_space<vmem>>, vector<1x128x128xbf16>,
    return
  }
  func.func @transform_0(%arg0: i32, %arg1: i32) -> (i32, i32) {
    %c0_i32 = arith.constant 0 : i32
    %c0_i32_0 = arith.constant 0 : i32
    %c0_i32_1 = arith.constant 0 : i32
    return %c0_i32, %c0_i32_0 : i32, i32
  }
  func.func @transform_1(%arg0: i32, %arg1: i32) -> (i32, i32) {
    %c0_i32 = arith.constant 0 : i32
    %c0_i32_0 = arith.constant 0 : i32
    %c0_i32_1 = arith.constant 0 : i32
    return %c0_i32, %c0_i32_0 : i32, i32
  }
  func.func @transform_2(%arg0: i32, %arg1: i32) -> (i32, i32, i32) {
    %c0_i32 = arith.constant 0 : i32
    %c0_i32_0 = arith.constant 0 : i32
    return %c0_i32, %arg0, %arg1 : i32, i32, i32
  }
  func.func @transform_3(%arg0: i32, %arg1: i32) -> (i32, i32, i32) {
    %c0_i32 = arith.constant 0 : i32
    %c0_i32_0 = arith.constant 0 : i32
    return %c0_i32, %arg0, %arg1 : i32, i32, i32
  }
  func.func @transform_4(%arg0: i32, %arg1: i32) -> (i32, i32, i32) {
    %c0_i32 = arith.constant 0 : i32
    %c0_i32_0 = arith.constant 0 : i32
    return %c0_i32, %arg0, %arg1 : i32, i32, i32
  }
}

</mosaic_0001>

<llo_original>
// kernel: tpu_custom_call.1
$region0: #{tpu_custom_call.1}
  #allocation0 [shape = 'u32[]', space=smem, size = 0x4, offset = 0x4, fixed_abs, tag = 'smem constant byte address 0x4 - core index']
  #allocation1 [shape = 'u32[144,128]{1,0:T(1,128)}', space=vmem, size = 0x12000, scoped, tag = 'internal scratch']
  %s0 = inlined_call_operand.hbm [shape: f32[2,4], index: 0, kind: input, shape index: {}]
  %s1 = inlined_call_operand.vmem [shape: f32[2,4], index: 1, kind: input, shape index: {}]
  %s2 = inlined_call_operand.hbm [shape: f32[4,128,128], index: 2, kind: input, shape index: {}]
  %s3 = inlined_call_operand.hbm [shape: bf16[2,128,128], index: 3, kind: output, shape index: {0}]
  %s4 = inlined_call_operand.hbm [shape: bf16[2,128,128], index: 4, kind: output, shape index: {1}]
  %5 = xla_tuple %s3, %s4
  %s6 = sld [smem:[#allocation0]]
  $region42: #{tpu_custom_call.1} parent=0
    _
  %s8 = ssub.s32 1, %s6
  %s9 = scalar_select 0, %s8, %s6
  $region1: #{tpu_custom_call.1} parent=0
    #allocation2 [shape = 'u8[1024]{0}', space=smem, size = 0x400, scoped, tag = 'input window, operand 0, single buffered']
    #allocation3 [shape = 's32[1]{0}', space=sflag, size = 0x4, scoped, tag = 'scoped memory for tpu_custom_call.1']
    #allocation4 [shape = 's32[1]{0}', space=sflag, size = 0x4, scoped, tag = 'scoped memory for tpu_custom_call.1']
    #allocation5 [shape = 's32[1]{0}', space=sflag, size = 0x4, scoped, tag = 'scoped memory for tpu_custom_call.1']
    #allocation6 [shape = 's32[1]{0}', space=sflag, size = 0x4, scoped, tag = 'scoped memory for tpu_custom_call.1']
    #allocation7 [shape = 'u8[1024]{0}', space=smem, size = 0x400, scoped, tag = 'input window, operand 1, single buffered']
    #allocation8 [shape = 'u8[262144]{0}', space=vmem, size = 0x40000, scoped, tag = 'input window, operand 2, single buffered']
    #allocation9 [shape = 'u8[65536]{0}', space=vmem, size = 0x10000, scoped, tag = 'output window, operand 0, single buffered']
    #allocation10 [shape = 'u8[65536]{0}', space=vmem, size = 0x10000, scoped, tag = 'output window, operand 1, single buffered']
    #allocation11 [shape = 's32[1]{0}', space=sflag, size = 0x4, scoped, tag = 'scoped memory for tpu_custom_call.1']
    %10 = vsyncpa [#allocation5], 0
    %11 = vsyncpa [#allocation6], 0
    %12 = vsyncpa [#allocation3], 0
    %13 = vsyncpa [#allocation4], 0
    %14 = vsyncpa [#allocation11], 0
    // Predicated region
    $region2: #{tpu_custom_call.1} parent=1 // pred_check
      _
    $region3: #{tpu_custom_call.1} parent=1 // pred_check_branch
      %16 = sbr.rel (0) target = $region5
    $region4: #{tpu_custom_call.1} parent=1 // pred_region
      %s18 = ssub.s32 32, 32
      %19 = vsyncadd [#allocation5], %s18
      %22 = dma.hbm_to_smem %s0, 32, [#allocation2], [#allocation5]
    $region5: #{tpu_custom_call.1} parent=1 // pred_fallthru
      _
    // Predicated region
    $region6: #{tpu_custom_call.1} parent=1 // pred_check
      _
    $region7: #{tpu_custom_call.1} parent=1 // pred_check_branch
      %24 = sbr.rel (0) target = $region9
    $region8: #{tpu_custom_call.1} parent=1 // pred_region
      %s26 = ssub.s32 32, 32
      %27 = vsyncadd [#allocation6], %s26
      %s29 = sshll.u32 %s1, 4
      %s30 = int_to_ptr.vmem [resolvable:$true] %s29
      %32 = dma.vmem_to_smem %s30, 32, [#allocation7], [#allocation6]
    $region9: #{tpu_custom_call.1} parent=1 // pred_fallthru
      _
    // Predicated region
    $region10: #{tpu_custom_call.1} parent=1 // pred_check
      _
    $region11: #{tpu_custom_call.1} parent=1 // pred_check_branch
      %34 = sbr.rel (0) target = $region13
    $region12: #{tpu_custom_call.1} parent=1 // pred_region
      %s36 = ssub.s32 8192, 8192
      %37 = vsyncadd [#allocation3], %s36
      %s38 = sshll.u32 [#allocation8], 4
      %s39 = int_to_ptr.vmem [resolvable:$true] %s38
      %44 = dma.hbm_to_vmem [thread:$0]  %s2, 8192, %s39, [#allocation3], 128, 128, 8
    $region13: #{tpu_custom_call.1} parent=1 // pred_fallthru
      _
    // Predicated region
    $region14: #{tpu_custom_call.1} parent=1 // pred_check
      _
    $region15: #{tpu_custom_call.1} parent=1 // pred_check_branch
      %46 = sbr.rel (0) target = $region17
    $region16: #{tpu_custom_call.1} parent=1 // pred_region
      %47 = dma.done [#allocation5], 32
    $region17: #{tpu_custom_call.1} parent=1 // pred_fallthru
      _
    // Predicated region
    $region18: #{tpu_custom_call.1} parent=1 // pred_check
      _
    $region19: #{tpu_custom_call.1} parent=1 // pred_check_branch
      %49 = sbr.rel (0) target = $region21
    $region20: #{tpu_custom_call.1} parent=1 // pred_region
      %50 = dma.done [#allocation6], 32
    $region21: #{tpu_custom_call.1} parent=1 // pred_fallthru
      _
    // Predicated region
    $region22: #{tpu_custom_call.1} parent=1 // pred_check
      _
    $region23: #{tpu_custom_call.1} parent=1 // pred_check_branch
      %52 = sbr.rel (0) target = $region25
    $region24: #{tpu_custom_call.1} parent=1 // pred_region
      %53 = dma.done [#allocation3], 8192
    $region25: #{tpu_custom_call.1} parent=1 // pred_fallthru
      _
    %54 = sfence
    %s55 = sld [smem:[#allocation2]]
    %v56 = vld [vmem:[#allocation8] sm:$0xff]
    %v57 = vld [vmem:[#allocation8 + $0x8] sm:$0xff]
    %v58 = vld [vmem:[#allocation8 + $0x10] sm:$0xff]
    %v59 = vld [vmem:[#allocation8 + $0x18] sm:$0xff]
    %v60 = vld [vmem:[#allocation8 + $0x20] sm:$0xff]
    %v61 = vld [vmem:[#allocation8 + $0x28] sm:$0xff]
    %v62 = vld [vmem:[#allocation8 + $0x30] sm:$0xff]
    %v63 = vld [vmem:[#allocation8 + $0x38] sm:$0xff]
    %v64 = vld [vmem:[#allocation8 + $0x40] sm:$0xff]
    %v65 = vld [vmem:[#allocation8 + $0x48] sm:$0xff]
    %v66 = vld [vmem:[#allocation8 + $0x50] sm:$0xff]
    %v67 = vld [vmem:[#allocation8 + $0x58] sm:$0xff]
    %v68 = vld [vmem:[#allocation8 + $0x60] sm:$0xff]
    %v69 = vld [vmem:[#allocation8 + $0x68] sm:$0xff]
    %v70 = vld [vmem:[#allocation8 + $0x70] sm:$0xff]
    %v71 = vld [vmem:[#allocation8 + $0x78] sm:$0xff]
    %v72 = vstv %s55
    %v73 = vmul.f32 %v72, %v56
    %v74 = vmul.f32 %v72, %v57
    %v75 = vmul.f32 %v72, %v58
    %v76 = vmul.f32 %v72, %v59
    %v77 = vmul.f32 %v72, %v60
    %v78 = vmul.f32 %v72, %v61
    %v79 = vmul.f32 %v72, %v62
    %v80 = vmul.f32 %v72, %v63
    %v81 = vmul.f32 %v72, %v64
    %v82 = vmul.f32 %v72, %v65
    %v83 = vmul.f32 %v72, %v66
    %v84 = vmul.f32 %v72, %v67
    %v85 = vmul.f32 %v72, %v68
    %v86 = vmul.f32 %v72, %v69
    %v87 = vmul.f32 %v72, %v70
    %v88 = vmul.f32 %v72, %v71
    %s89 = sld [smem:[#allocation7]]
    %v90 = vstv %s89
    %v91 = vmul.f32 %v90, %v56
    %v92 = vmul.f32 %v90, %v57
    %v93 = vmul.f32 %v90, %v58
    %v94 = vmul.f32 %v90, %v59
    %v95 = vmul.f32 %v90, %v60
    %v96 = vmul.f32 %v90, %v61
    %v97 = vmul.f32 %v90, %v62
    %v98 = vmul.f32 %v90, %v63
    %v99 = vmul.f32 %v90, %v64
    %v100 = vmul.f32 %v90, %v65
    %v101 = vmul.f32 %v90, %v66
    %v102 = vmul.f32 %v90, %v67
    %v103 = vmul.f32 %v90, %v68
    %v104 = vmul.f32 %v90, %v69
    %v105 = vmul.f32 %v90, %v70
    %v106 = vmul.f32 %v90, %v71
    %s107 = scalar_lea.vmem [#allocation8], 128
    %v108 = vld [vmem:[%s107] sm:$0xff]
    %v109 = vld [vmem:[%s107 + $0x8] sm:$0xff]
    %v110 = vld [vmem:[%s107 + $0x10] sm:$0xff]
    %v111 = vld [vmem:[%s107 + $0x18] sm:$0xff]
    %v112 = vld [vmem:[%s107 + $0x20] sm:$0xff]
    %v113 = vld [vmem:[%s107 + $0x28] sm:$0xff]
    %v114 = vld [vmem:[%s107 + $0x30] sm:$0xff]
    %v115 = vld [vmem:[%s107 + $0x38] sm:$0xff]
    %v116 = vld [vmem:[%s107 + $0x40] sm:$0xff]
    %v117 = vld [vmem:[%s107 + $0x48] sm:$0xff]
    %v118 = vld [vmem:[%s107 + $0x50] sm:$0xff]
    %v119 = vld [vmem:[%s107 + $0x58] sm:$0xff]
    %v120 = vld [vmem:[%s107 + $0x60] sm:$0xff]
    %v121 = vld [vmem:[%s107 + $0x68] sm:$0xff]
    %v122 = vld [vmem:[%s107 + $0x70] sm:$0xff]
    %v123 = vld [vmem:[%s107 + $0x78] sm:$0xff]
    %s124 = sld [smem:[#allocation2 + $0x1]]
    %v125 = vstv %s124
    %v126 = vmul.f32 %v125, %v108
    %v127 = vmul.f32 %v125, %v109
    %v128 = vmul.f32 %v125, %v110
    %v129 = vmul.f32 %v125, %v111
    %v130 = vmul.f32 %v125, %v112
    %v131 = vmul.f32 %v125, %v113
    %v132 = vmul.f32 %v125, %v114
    %v133 = vmul.f32 %v125, %v115
    %v134 = vmul.f32 %v125, %v116
    %v135 = vmul.f32 %v125, %v117
    %v136 = vmul.f32 %v125, %v118
    %v137 = vmul.f32 %v125, %v119
    %v138 = vmul.f32 %v125, %v120
    %v139 = vmul.f32 %v125, %v121
    %v140 = vmul.f32 %v125, %v122
    %v141 = vmul.f32 %v125, %v123
    %v142 = vadd.f32 %v73, %v126
    %v143 = vadd.f32 %v74, %v127
    %v144 = vadd.f32 %v75, %v128
    %v145 = vadd.f32 %v76, %v129
    %v146 = vadd.f32 %v77, %v130
    %v147 = vadd.f32 %v78, %v131
    %v148 = vadd.f32 %v79, %v132
    %v149 = vadd.f32 %v80, %v133
    %v150 = vadd.f32 %v81, %v134
    %v151 = vadd.f32 %v82, %v135
    %v152 = vadd.f32 %v83, %v136
    %v153 = vadd.f32 %v84, %v137
    %v154 = vadd.f32 %v85, %v138
    %v155 = vadd.f32 %v86, %v139
    %v156 = vadd.f32 %v87, %v140
    %v157 = vadd.f32 %v88, %v141
    %s158 = sld [smem:[#allocation7 + $0x1]]
    %v159 = vstv %s158
    %v160 = vmul.f32 %v159, %v108
    %v161 = vmul.f32 %v159, %v109
    %v162 = vmul.f32 %v159, %v110
    %v163 = vmul.f32 %v159, %v111
    %v164 = vmul.f32 %v159, %v112
    %v165 = vmul.f32 %v159, %v113
    %v166 = vmul.f32 %v159, %v114
    %v167 = vmul.f32 %v159, %v115
    %v168 = vmul.f32 %v159, %v116
    %v169 = vmul.f32 %v159, %v117
    %v170 = vmul.f32 %v159, %v118
    %v171 = vmul.f32 %v159, %v119
    %v172 = vmul.f32 %v159, %v120
    %v173 = vmul.f32 %v159, %v121
    %v174 = vmul.f32 %v159, %v122
    %v175 = vmul.f32 %v159, %v123
    %v176 = vadd.f32 %v91, %v160
    %v177 = vadd.f32 %v92, %v161
    %v178 = vadd.f32 %v93, %v162
    %v179 = vadd.f32 %v94, %v163
    %v180 = vadd.f32 %v95, %v164
    %v181 = vadd.f32 %v96, %v165
    %v182 = vadd.f32 %v97, %v166
    %v183 = vadd.f32 %v98, %v167
    %v184 = vadd.f32 %v99, %v168
    %v185 = vadd.f32 %v100, %v169
    %v186 = vadd.f32 %v101, %v170
    %v187 = vadd.f32 %v102, %v171
    %v188 = vadd.f32 %v103, %v172
    %v189 = vadd.f32 %v104, %v173
    %v190 = vadd.f32 %v105, %v174
    %v191 = vadd.f32 %v106, %v175
    %s192 = scalar_lea.vmem [#allocation8], 256
    %v193 = vld [vmem:[%s192] sm:$0xff]
    %v194 = vld [vmem:[%s192 + $0x8] sm:$0xff]
    %v195 = vld [vmem:[%s192 + $0x10] sm:$0xff]
    %v196 = vld [vmem:[%s192 + $0x18] sm:$0xff]
    %v197 = vld [vmem:[%s192 + $0x20] sm:$0xff]
    %v198 = vld [vmem:[%s192 + $0x28] sm:$0xff]
    %v199 = vld [vmem:[%s192 + $0x30] sm:$0xff]
    %v200 = vld [vmem:[%s192 + $0x38] sm:$0xff]
    %v201 = vld [vmem:[%s192 + $0x40] sm:$0xff]
    %v202 = vld [vmem:[%s192 + $0x48] sm:$0xff]
    %v203 = vld [vmem:[%s192 + $0x50] sm:$0xff]
    %v204 = vld [vmem:[%s192 + $0x58] sm:$0xff]
    %v205 = vld [vmem:[%s192 + $0x60] sm:$0xff]
    %v206 = vld [vmem:[%s192 + $0x68] sm:$0xff]
    %v207 = vld [vmem:[%s192 + $0x70] sm:$0xff]
    %v208 = vld [vmem:[%s192 + $0x78] sm:$0xff]
    %s209 = sld [smem:[#allocation2 + $0x2]]
    %v210 = vstv %s209
    %v211 = vmul.f32 %v210, %v193
    %v212 = vmul.f32 %v210, %v194
    %v213 = vmul.f32 %v210, %v195
    %v214 = vmul.f32 %v210, %v196
    %v215 = vmul.f32 %v210, %v197
    %v216 = vmul.f32 %v210, %v198
    %v217 = vmul.f32 %v210, %v199
    %v218 = vmul.f32 %v210, %v200
    %v219 = vmul.f32 %v210, %v201
    %v220 = vmul.f32 %v210, %v202
    %v221 = vmul.f32 %v210, %v203
    %v222 = vmul.f32 %v210, %v204
    %v223 = vmul.f32 %v210, %v205
    %v224 = vmul.f32 %v210, %v206
    %v225 = vmul.f32 %v210, %v207
    %v226 = vmul.f32 %v210, %v208
    %v227 = vadd.f32 %v142, %v211
    %v228 = vadd.f32 %v143, %v212
    %v229 = vadd.f32 %v144, %v213
    %v230 = vadd.f32 %v145, %v214
    %v231 = vadd.f32 %v146, %v215
    %v232 = vadd.f32 %v147, %v216
    %v233 = vadd.f32 %v148, %v217
    %v234 = vadd.f32 %v149, %v218
    %v235 = vadd.f32 %v150, %v219
    %v236 = vadd.f32 %v151, %v220
    %v237 = vadd.f32 %v152, %v221
    %v238 = vadd.f32 %v153, %v222
    %v239 = vadd.f32 %v154, %v223
    %v240 = vadd.f32 %v155, %v224
    %v241 = vadd.f32 %v156, %v225
    %v242 = vadd.f32 %v157, %v226
    %s243 = sld [smem:[#allocation7 + $0x2]]
    %v244 = vstv %s243
    %v245 = vmul.f32 %v244, %v193
    %v246 = vmul.f32 %v244, %v194
    %v247 = vmul.f32 %v244, %v195
    %v248 = vmul.f32 %v244, %v196
    %v249 = vmul.f32 %v244, %v197
    %v250 = vmul.f32 %v244, %v198
    %v251 = vmul.f32 %v244, %v199
    %v252 = vmul.f32 %v244, %v200
    %v253 = vmul.f32 %v244, %v201
    %v254 = vmul.f32 %v244, %v202
    %v255 = vmul.f32 %v244, %v203
    %v256 = vmul.f32 %v244, %v204
    %v257 = vmul.f32 %v244, %v205
    %v258 = vmul.f32 %v244, %v206
    %v259 = vmul.f32 %v244, %v207
    %v260 = vmul.f32 %v244, %v208
    %v261 = vadd.f32 %v176, %v245
    %v262 = vadd.f32 %v177, %v246
    %v263 = vadd.f32 %v178, %v247
    %v264 = vadd.f32 %v179, %v248
    %v265 = vadd.f32 %v180, %v249
    %v266 = vadd.f32 %v181, %v250
    %v267 = vadd.f32 %v182, %v251
    %v268 = vadd.f32 %v183, %v252
    %v269 = vadd.f32 %v184, %v253
    %v270 = vadd.f32 %v185, %v254
    %v271 = vadd.f32 %v186, %v255
    %v272 = vadd.f32 %v187, %v256
    %v273 = vadd.f32 %v188, %v257
    %v274 = vadd.f32 %v189, %v258
    %v275 = vadd.f32 %v190, %v259
    %v276 = vadd.f32 %v191, %v260
    %s277 = scalar_lea.vmem [#allocation8], 384
    %v278 = vld [vmem:[%s277] sm:$0xff]
    %v279 = vld [vmem:[%s277 + $0x8] sm:$0xff]
    %v280 = vld [vmem:[%s277 + $0x10] sm:$0xff]
    %v281 = vld [vmem:[%s277 + $0x18] sm:$0xff]
    %v282 = vld [vmem:[%s277 + $0x20] sm:$0xff]
    %v283 = vld [vmem:[%s277 + $0x28] sm:$0xff]
    %v284 = vld [vmem:[%s277 + $0x30] sm:$0xff]
    %v285 = vld [vmem:[%s277 + $0x38] sm:$0xff]
    %v286 = vld [vmem:[%s277 + $0x40] sm:$0xff]
    %v287 = vld [vmem:[%s277 + $0x48] sm:$0xff]
    %v288 = vld [vmem:[%s277 + $0x50] sm:$0xff]
    %v289 = vld [vmem:[%s277 + $0x58] sm:$0xff]
    %v290 = vld [vmem:[%s277 + $0x60] sm:$0xff]
    %v291 = vld [vmem:[%s277 + $0x68] sm:$0xff]
    %v292 = vld [vmem:[%s277 + $0x70] sm:$0xff]
    %v293 = vld [vmem:[%s277 + $0x78] sm:$0xff]
    %s294 = sld [smem:[#allocation2 + $0x3]]
    %v295 = vstv %s294
    %v296 = vmul.f32 %v295, %v278
    %v297 = vmul.f32 %v295, %v279
    %v298 = vmul.f32 %v295, %v280
    %v299 = vmul.f32 %v295, %v281
    %v300 = vmul.f32 %v295, %v282
    %v301 = vmul.f32 %v295, %v283
    %v302 = vmul.f32 %v295, %v284
    %v303 = vmul.f32 %v295, %v285
    %v304 = vmul.f32 %v295, %v286
    %v305 = vmul.f32 %v295, %v287
    %v306 = vmul.f32 %v295, %v288
    %v307 = vmul.f32 %v295, %v289
    %v308 = vmul.f32 %v295, %v290
    %v309 = vmul.f32 %v295, %v291
    %v310 = vmul.f32 %v295, %v292
    %v311 = vmul.f32 %v295, %v293
    %v312 = vadd.f32 %v227, %v296
    %v313 = vadd.f32 %v228, %v297
    %v314 = vadd.f32 %v229, %v298
    %v315 = vadd.f32 %v230, %v299
    %v316 = vadd.f32 %v231, %v300
    %v317 = vadd.f32 %v232, %v301
    %v318 = vadd.f32 %v233, %v302
    %v319 = vadd.f32 %v234, %v303
    %v320 = vadd.f32 %v235, %v304
    %v321 = vadd.f32 %v236, %v305
    %v322 = vadd.f32 %v237, %v306
    %v323 = vadd.f32 %v238, %v307
    %v324 = vadd.f32 %v239, %v308
    %v325 = vadd.f32 %v240, %v309
    %v326 = vadd.f32 %v241, %v310
    %v327 = vadd.f32 %v242, %v311
    %s328 = sld [smem:[#allocation7 + $0x3]]
    %v329 = vstv %s328
    %v330 = vmul.f32 %v329, %v278
    %v331 = vmul.f32 %v329, %v279
    %v332 = vmul.f32 %v329, %v280
    %v333 = vmul.f32 %v329, %v281
    %v334 = vmul.f32 %v329, %v282
    %v335 = vmul.f32 %v329, %v283
    %v336 = vmul.f32 %v329, %v284
    %v337 = vmul.f32 %v329, %v285
    %v338 = vmul.f32 %v329, %v286
    %v339 = vmul.f32 %v329, %v287
    %v340 = vmul.f32 %v329, %v288
    %v341 = vmul.f32 %v329, %v289
    %v342 = vmul.f32 %v329, %v290
    %v343 = vmul.f32 %v329, %v291
    %v344 = vmul.f32 %v329, %v292
    %v345 = vmul.f32 %v329, %v293
    %v346 = vadd.f32 %v261, %v330
    %v347 = vadd.f32 %v262, %v331
    %v348 = vadd.f32 %v263, %v332
    %v349 = vadd.f32 %v264, %v333
    %v350 = vadd.f32 %v265, %v334
    %v351 = vadd.f32 %v266, %v335
    %v352 = vadd.f32 %v267, %v336
    %v353 = vadd.f32 %v268, %v337
    %v354 = vadd.f32 %v269, %v338
    %v355 = vadd.f32 %v270, %v339
    %v356 = vadd.f32 %v271, %v340
    %v357 = vadd.f32 %v272, %v341
    %v358 = vadd.f32 %v273, %v342
    %v359 = vadd.f32 %v274, %v343
    %v360 = vadd.f32 %v275, %v344
    %v361 = vadd.f32 %v276, %v345
    %v362 = vpack.c.bf16 %v313, %v312
    %v363 = vpack.c.bf16 %v315, %v314
    %v364 = vpack.c.bf16 %v317, %v316
    %v365 = vpack.c.bf16 %v319, %v318
    %v366 = vpack.c.bf16 %v321, %v320
    %v367 = vpack.c.bf16 %v323, %v322
    %v368 = vpack.c.bf16 %v325, %v324
    %v369 = vpack.c.bf16 %v327, %v326
    %v378 = vunpack.c.l.b16 %v362
    %v379 = vunpack.c.h.b16 %v362
    %v380 = vunpack.c.l.b16 %v363
    %v381 = vunpack.c.h.b16 %v363
    %v382 = vunpack.c.l.b16 %v364
    %v383 = vunpack.c.h.b16 %v364
    %v384 = vunpack.c.l.b16 %v365
    %v385 = vunpack.c.h.b16 %v365
    %v386 = vunpack.c.l.b16 %v366
    %v387 = vunpack.c.h.b16 %v366
    %v388 = vunpack.c.l.b16 %v367
    %v389 = vunpack.c.h.b16 %v367
    %v390 = vunpack.c.l.b16 %v368
    %v391 = vunpack.c.h.b16 %v368
    %v392 = vunpack.c.l.b16 %v369
    %v393 = vunpack.c.h.b16 %v369
    %v394 = vpack.c.b16 %v378, %v378
    %v395 = vpack.c.b16 %v379, %v379
    %v396 = vpack.c.b16 %v380, %v380
    %v397 = vpack.c.b16 %v381, %v381
    %v398 = vpack.c.b16 %v382, %v382
    %v399 = vpack.c.b16 %v383, %v383
    %v400 = vpack.c.b16 %v384, %v384
    %v401 = vpack.c.b16 %v385, %v385
    %v402 = vpack.c.b16 %v386, %v386
    %v403 = vpack.c.b16 %v387, %v387
    %v404 = vpack.c.b16 %v388, %v388
    %v405 = vpack.c.b16 %v389, %v389
    %v406 = vpack.c.b16 %v390, %v390
    %v407 = vpack.c.b16 %v391, %v391
    %v408 = vpack.c.b16 %v392, %v392
    %v409 = vpack.c.b16 %v393, %v393
    %426 = vst [vmem:[#allocation9] sm:$0xf] %v394
    %427 = vst [vmem:[#allocation9 + $0x4] sm:$0xf] %v395
    %428 = vst [vmem:[#allocation9 + $0x8] sm:$0xf] %v396
    %429 = vst [vmem:[#allocation9 + $0xc] sm:$0xf] %v397
    %430 = vst [vmem:[#allocation9 + $0x10] sm:$0xf] %v398
    %431 = vst [vmem:[#allocation9 + $0x14] sm:$0xf] %v399
    %432 = vst [vmem:[#allocation9 + $0x18] sm:$0xf] %v400
    %433 = vst [vmem:[#allocation9 + $0x1c] sm:$0xf] %v401
    %434 = vst [vmem:[#allocation9 + $0x20] sm:$0xf] %v402
    %435 = vst [vmem:[#allocation9 + $0x24] sm:$0xf] %v403
    %436 = vst [vmem:[#allocation9 + $0x28] sm:$0xf] %v404
    %437 = vst [vmem:[#allocation9 + $0x2c] sm:$0xf] %v405
    %438 = vst [vmem:[#allocation9 + $0x30] sm:$0xf] %v406
    %439 = vst [vmem:[#allocation9 + $0x34] sm:$0xf] %v407
    %440 = vst [vmem:[#allocation9 + $0x38] sm:$0xf] %v408
    %441 = vst [vmem:[#allocation9 + $0x3c] sm:$0xf] %v409
    %v442 = vpack.c.bf16 %v347, %v346
    %v443 = vpack.c.bf16 %v349, %v348
    %v444 = vpack.c.bf16 %v351, %v350
    %v445 = vpack.c.bf16 %v353, %v352
    %v446 = vpack.c.bf16 %v355, %v354
    %v447 = vpack.c.bf16 %v357, %v356
    %v448 = vpack.c.bf16 %v359, %v358
    %v449 = vpack.c.bf16 %v361, %v360
    %v458 = vunpack.c.l.b16 %v442
    %v459 = vunpack.c.h.b16 %v442
    %v460 = vunpack.c.l.b16 %v443
    %v461 = vunpack.c.h.b16 %v443
    %v462 = vunpack.c.l.b16 %v444
    %v463 = vunpack.c.h.b16 %v444
    %v464 = vunpack.c.l.b16 %v445
    %v465 = vunpack.c.h.b16 %v445
    %v466 = vunpack.c.l.b16 %v446
    %v467 = vunpack.c.h.b16 %v446
    %v468 = vunpack.c.l.b16 %v447
    %v469 = vunpack.c.h.b16 %v447
    %v470 = vunpack.c.l.b16 %v448
    %v471 = vunpack.c.h.b16 %v448
    %v472 = vunpack.c.l.b16 %v449
    %v473 = vunpack.c.h.b16 %v449
    %v474 = vpack.c.b16 %v458, %v458
    %v475 = vpack.c.b16 %v459, %v459
    %v476 = vpack.c.b16 %v460, %v460
    %v477 = vpack.c.b16 %v461, %v461
    %v478 = vpack.c.b16 %v462, %v462
    %v479 = vpack.c.b16 %v463, %v463
    %v480 = vpack.c.b16 %v464, %v464
    %v481 = vpack.c.b16 %v465, %v465
    %v482 = vpack.c.b16 %v466, %v466
    %v483 = vpack.c.b16 %v467, %v467
    %v484 = vpack.c.b16 %v468, %v468
    %v485 = vpack.c.b16 %v469, %v469
    %v486 = vpack.c.b16 %v470, %v470
    %v487 = vpack.c.b16 %v471, %v471
    %v488 = vpack.c.b16 %v472, %v472
    %v489 = vpack.c.b16 %v473, %v473
    %506 = vst [vmem:[#allocation10] sm:$0xf] %v474
    %507 = vst [vmem:[#allocation10 + $0x4] sm:$0xf] %v475
    %508 = vst [vmem:[#allocation10 + $0x8] sm:$0xf] %v476
    %509 = vst [vmem:[#allocation10 + $0xc] sm:$0xf] %v477
    %510 = vst [vmem:[#allocation10 + $0x10] sm:$0xf] %v478
    %511 = vst [vmem:[#allocation10 + $0x14] sm:$0xf] %v479
    %512 = vst [vmem:[#allocation10 + $0x18] sm:$0xf] %v480
    %513 = vst [vmem:[#allocation10 + $0x1c] sm:$0xf] %v481
    %514 = vst [vmem:[#allocation10 + $0x20] sm:$0xf] %v482
    %515 = vst [vmem:[#allocation10 + $0x24] sm:$0xf] %v483
    %516 = vst [vmem:[#allocation10 + $0x28] sm:$0xf] %v484
    %517 = vst [vmem:[#allocation10 + $0x2c] sm:$0xf] %v485
    %518 = vst [vmem:[#allocation10 + $0x30] sm:$0xf] %v486
    %519 = vst [vmem:[#allocation10 + $0x34] sm:$0xf] %v487
    %520 = vst [vmem:[#allocation10 + $0x38] sm:$0xf] %v488
    %521 = vst [vmem:[#allocation10 + $0x3c] sm:$0xf] %v489
    %s522 = sld [smem:[#allocation2 + $0x80]]
    %v523 = vld [vmem:[#allocation8] sm:$0xff]
    %v524 = vld [vmem:[#allocation8 + $0x8] sm:$0xff]
    %v525 = vld [vmem:[#allocation8 + $0x10] sm:$0xff]
    %v526 = vld [vmem:[#allocation8 + $0x18] sm:$0xff]
    %v527 = vld [vmem:[#allocation8 + $0x20] sm:$0xff]
    %v528 = vld [vmem:[#allocation8 + $0x28] sm:$0xff]
    %v529 = vld [vmem:[#allocation8 + $0x30] sm:$0xff]
    %v530 = vld [vmem:[#allocation8 + $0x38] sm:$0xff]
    %v531 = vld [vmem:[#allocation8 + $0x40] sm:$0xff]
    %v532 = vld [vmem:[#allocation8 + $0x48] sm:$0xff]
    %v533 = vld [vmem:[#allocation8 + $0x50] sm:$0xff]
    %v534 = vld [vmem:[#allocation8 + $0x58] sm:$0xff]
    %v535 = vld [vmem:[#allocation8 + $0x60] sm:$0xff]
    %v536 = vld [vmem:[#allocation8 + $0x68] sm:$0xff]
    %v537 = vld [vmem:[#allocation8 + $0x70] sm:$0xff]
    %v538 = vld [vmem:[#allocation8 + $0x78] sm:$0xff]
    %v539 = vstv %s522
    %v540 = vmul.f32 %v539, %v523
    %v541 = vmul.f32 %v539, %v524
    %v542 = vmul.f32 %v539, %v525
    %v543 = vmul.f32 %v539, %v526
    %v544 = vmul.f32 %v539, %v527
    %v545 = vmul.f32 %v539, %v528
    %v546 = vmul.f32 %v539, %v529
    %v547 = vmul.f32 %v539, %v530
    %v548 = vmul.f32 %v539, %v531
    %v549 = vmul.f32 %v539, %v532
    %v550 = vmul.f32 %v539, %v533
    %v551 = vmul.f32 %v539, %v534
    %v552 = vmul.f32 %v539, %v535
    %v553 = vmul.f32 %v539, %v536
    %v554 = vmul.f32 %v539, %v537
    %v555 = vmul.f32 %v539, %v538
    %s556 = sld [smem:[#allocation7 + $0x80]]
    %v557 = vstv %s556
    %v558 = vmul.f32 %v557, %v523
    %v559 = vmul.f32 %v557, %v524
    %v560 = vmul.f32 %v557, %v525
    %v561 = vmul.f32 %v557, %v526
    %v562 = vmul.f32 %v557, %v527
    %v563 = vmul.f32 %v557, %v528
    %v564 = vmul.f32 %v557, %v529
    %v565 = vmul.f32 %v557, %v530
    %v566 = vmul.f32 %v557, %v531
    %v567 = vmul.f32 %v557, %v532
    %v568 = vmul.f32 %v557, %v533
    %v569 = vmul.f32 %v557, %v534
    %v570 = vmul.f32 %v557, %v535
    %v571 = vmul.f32 %v557, %v536
    %v572 = vmul.f32 %v557, %v537
    %v573 = vmul.f32 %v557, %v538
    %v574 = vld [vmem:[%s107] sm:$0xff]
    %v575 = vld [vmem:[%s107 + $0x8] sm:$0xff]
    %v576 = vld [vmem:[%s107 + $0x10] sm:$0xff]
    %v577 = vld [vmem:[%s107 + $0x18] sm:$0xff]
    %v578 = vld [vmem:[%s107 + $0x20] sm:$0xff]
    %v579 = vld [vmem:[%s107 + $0x28] sm:$0xff]
    %v580 = vld [vmem:[%s107 + $0x30] sm:$0xff]
    %v581 = vld [vmem:[%s107 + $0x38] sm:$0xff]
    %v582 = vld [vmem:[%s107 + $0x40] sm:$0xff]
    %v583 = vld [vmem:[%s107 + $0x48] sm:$0xff]
    %v584 = vld [vmem:[%s107 + $0x50] sm:$0xff]
    %v585 = vld [vmem:[%s107 + $0x58] sm:$0xff]
    %v586 = vld [vmem:[%s107 + $0x60] sm:$0xff]
    %v587 = vld [vmem:[%s107 + $0x68] sm:$0xff]
    %v588 = vld [vmem:[%s107 + $0x70] sm:$0xff]
    %v589 = vld [vmem:[%s107 + $0x78] sm:$0xff]
    %s590 = sld [smem:[#allocation2 + $0x81]]
    %v591 = vstv %s590
    %v592 = vmul.f32 %v591, %v574
    %v593 = vmul.f32 %v591, %v575
    %v594 = vmul.f32 %v591, %v576
    %v595 = vmul.f32 %v591, %v577
    %v596 = vmul.f32 %v591, %v578
    %v597 = vmul.f32 %v591, %v579
    %v598 = vmul.f32 %v591, %v580
    %v599 = vmul.f32 %v591, %v581
    %v600 = vmul.f32 %v591, %v582
    %v601 = vmul.f32 %v591, %v583
    %v602 = vmul.f32 %v591, %v584
    %v603 = vmul.f32 %v591, %v585
    %v604 = vmul.f32 %v591, %v586
    %v605 = vmul.f32 %v591, %v587
    %v606 = vmul.f32 %v591, %v588
    %v607 = vmul.f32 %v591, %v589
    %v608 = vadd.f32 %v540, %v592
    %v609 = vadd.f32 %v541, %v593
    %v610 = vadd.f32 %v542, %v594
    %v611 = vadd.f32 %v543, %v595
    %v612 = vadd.f32 %v544, %v596
    %v613 = vadd.f32 %v545, %v597
    %v614 = vadd.f32 %v546, %v598
    %v615 = vadd.f32 %v547, %v599
    %v616 = vadd.f32 %v548, %v600
    %v617 = vadd.f32 %v549, %v601
    %v618 = vadd.f32 %v550, %v602
    %v619 = vadd.f32 %v551, %v603
    %v620 = vadd.f32 %v552, %v604
    %v621 = vadd.f32 %v553, %v605
    %v622 = vadd.f32 %v554, %v606
    %v623 = vadd.f32 %v555, %v607
    %s624 = sld [smem:[#allocation7 + $0x81]]
    %v625 = vstv %s624
    %v626 = vmul.f32 %v625, %v574
    %v627 = vmul.f32 %v625, %v575
    %v628 = vmul.f32 %v625, %v576
    %v629 = vmul.f32 %v625, %v577
    %v630 = vmul.f32 %v625, %v578
    %v631 = vmul.f32 %v625, %v579
    %v632 = vmul.f32 %v625, %v580
    %v633 = vmul.f32 %v625, %v581
    %v634 = vmul.f32 %v625, %v582
    %v635 = vmul.f32 %v625, %v583
    %v636 = vmul.f32 %v625, %v584
    %v637 = vmul.f32 %v625, %v585
    %v638 = vmul.f32 %v625, %v586
    %v639 = vmul.f32 %v625, %v587
    %v640 = vmul.f32 %v625, %v588
    %v641 = vmul.f32 %v625, %v589
    %v642 = vadd.f32 %v558, %v626
    %v643 = vadd.f32 %v559, %v627
    %v644 = vadd.f32 %v560, %v628
    %v645 = vadd.f32 %v561, %v629
    %v646 = vadd.f32 %v562, %v630
    %v647 = vadd.f32 %v563, %v631
    %v648 = vadd.f32 %v564, %v632
    %v649 = vadd.f32 %v565, %v633
    %v650 = vadd.f32 %v566, %v634
    %v651 = vadd.f32 %v567, %v635
    %v652 = vadd.f32 %v568, %v636
    %v653 = vadd.f32 %v569, %v637
    %v654 = vadd.f32 %v570, %v638
    %v655 = vadd.f32 %v571, %v639
    %v656 = vadd.f32 %v572, %v640
    %v657 = vadd.f32 %v573, %v641
    %v658 = vld [vmem:[%s192] sm:$0xff]
    %v659 = vld [vmem:[%s192 + $0x8] sm:$0xff]
    %v660 = vld [vmem:[%s192 + $0x10] sm:$0xff]
    %v661 = vld [vmem:[%s192 + $0x18] sm:$0xff]
    %v662 = vld [vmem:[%s192 + $0x20] sm:$0xff]
    %v663 = vld [vmem:[%s192 + $0x28] sm:$0xff]
    %v664 = vld [vmem:[%s192 + $0x30] sm:$0xff]
    %v665 = vld [vmem:[%s192 + $0x38] sm:$0xff]
    %v666 = vld [vmem:[%s192 + $0x40] sm:$0xff]
    %v667 = vld [vmem:[%s192 + $0x48] sm:$0xff]
    %v668 = vld [vmem:[%s192 + $0x50] sm:$0xff]
    %v669 = vld [vmem:[%s192 + $0x58] sm:$0xff]
    %v670 = vld [vmem:[%s192 + $0x60] sm:$0xff]
    %v671 = vld [vmem:[%s192 + $0x68] sm:$0xff]
    %v672 = vld [vmem:[%s192 + $0x70] sm:$0xff]
    %v673 = vld [vmem:[%s192 + $0x78] sm:$0xff]
    %s674 = sld [smem:[#allocation2 + $0x82]]
    %v675 = vstv %s674
    %v676 = vmul.f32 %v675, %v658
    %v677 = vmul.f32 %v675, %v659
    %v678 = vmul.f32 %v675, %v660
    %v679 = vmul.f32 %v675, %v661
    %v680 = vmul.f32 %v675, %v662
    %v681 = vmul.f32 %v675, %v663
    %v682 = vmul.f32 %v675, %v664
    %v683 = vmul.f32 %v675, %v665
    %v684 = vmul.f32 %v675, %v666
    %v685 = vmul.f32 %v675, %v667
    %v686 = vmul.f32 %v675, %v668
    %v687 = vmul.f32 %v675, %v669
    %v688 = vmul.f32 %v675, %v670
    %v689 = vmul.f32 %v675, %v671
    %v690 = vmul.f32 %v675, %v672
    %v691 = vmul.f32 %v675, %v673
    %v692 = vadd.f32 %v608, %v676
    %v693 = vadd.f32 %v609, %v677
    %v694 = vadd.f32 %v610, %v678
    %v695 = vadd.f32 %v611, %v679
    %v696 = vadd.f32 %v612, %v680
    %v697 = vadd.f32 %v613, %v681
    %v698 = vadd.f32 %v614, %v682
    %v699 = vadd.f32 %v615, %v683
    %v700 = vadd.f32 %v616, %v684
    %v701 = vadd.f32 %v617, %v685
    %v702 = vadd.f32 %v618, %v686
    %v703 = vadd.f32 %v619, %v687
    %v704 = vadd.f32 %v620, %v688
    %v705 = vadd.f32 %v621, %v689
    %v706 = vadd.f32 %v622, %v690
    %v707 = vadd.f32 %v623, %v691
    %s708 = sld [smem:[#allocation7 + $0x82]]
    %v709 = vstv %s708
    %v710 = vmul.f32 %v709, %v658
    %v711 = vmul.f32 %v709, %v659
    %v712 = vmul.f32 %v709, %v660
    %v713 = vmul.f32 %v709, %v661
    %v714 = vmul.f32 %v709, %v662
    %v715 = vmul.f32 %v709, %v663
    %v716 = vmul.f32 %v709, %v664
    %v717 = vmul.f32 %v709, %v665
    %v718 = vmul.f32 %v709, %v666
    %v719 = vmul.f32 %v709, %v667
    %v720 = vmul.f32 %v709, %v668
    %v721 = vmul.f32 %v709, %v669
    %v722 = vmul.f32 %v709, %v670
    %v723 = vmul.f32 %v709, %v671
    %v724 = vmul.f32 %v709, %v672
    %v725 = vmul.f32 %v709, %v673
    %v726 = vadd.f32 %v642, %v710
    %v727 = vadd.f32 %v643, %v711
    %v728 = vadd.f32 %v644, %v712
    %v729 = vadd.f32 %v645, %v713
    %v730 = vadd.f32 %v646, %v714
    %v731 = vadd.f32 %v647, %v715
    %v732 = vadd.f32 %v648, %v716
    %v733 = vadd.f32 %v649, %v717
    %v734 = vadd.f32 %v650, %v718
    %v735 = vadd.f32 %v651, %v719
    %v736 = vadd.f32 %v652, %v720
    %v737 = vadd.f32 %v653, %v721
    %v738 = vadd.f32 %v654, %v722
    %v739 = vadd.f32 %v655, %v723
    %v740 = vadd.f32 %v656, %v724
    %v741 = vadd.f32 %v657, %v725
    %v742 = vld [vmem:[%s277] sm:$0xff]
    %v743 = vld [vmem:[%s277 + $0x8] sm:$0xff]
    %v744 = vld [vmem:[%s277 + $0x10] sm:$0xff]
    %v745 = vld [vmem:[%s277 + $0x18] sm:$0xff]
    %v746 = vld [vmem:[%s277 + $0x20] sm:$0xff]
    %v747 = vld [vmem:[%s277 + $0x28] sm:$0xff]
    %v748 = vld [vmem:[%s277 + $0x30] sm:$0xff]
    %v749 = vld [vmem:[%s277 + $0x38] sm:$0xff]
    %v750 = vld [vmem:[%s277 + $0x40] sm:$0xff]
    %v751 = vld [vmem:[%s277 + $0x48] sm:$0xff]
    %v752 = vld [vmem:[%s277 + $0x50] sm:$0xff]
    %v753 = vld [vmem:[%s277 + $0x58] sm:$0xff]
    %v754 = vld [vmem:[%s277 + $0x60] sm:$0xff]
    %v755 = vld [vmem:[%s277 + $0x68] sm:$0xff]
    %v756 = vld [vmem:[%s277 + $0x70] sm:$0xff]
    %v757 = vld [vmem:[%s277 + $0x78] sm:$0xff]
    %s758 = sld [smem:[#allocation2 + $0x83]]
    %v759 = vstv %s758
    %v760 = vmul.f32 %v759, %v742
    %v761 = vmul.f32 %v759, %v743
    %v762 = vmul.f32 %v759, %v744
    %v763 = vmul.f32 %v759, %v745
    %v764 = vmul.f32 %v759, %v746
    %v765 = vmul.f32 %v759, %v747
    %v766 = vmul.f32 %v759, %v748
    %v767 = vmul.f32 %v759, %v749
    %v768 = vmul.f32 %v759, %v750
    %v769 = vmul.f32 %v759, %v751
    %v770 = vmul.f32 %v759, %v752
    %v771 = vmul.f32 %v759, %v753
    %v772 = vmul.f32 %v759, %v754
    %v773 = vmul.f32 %v759, %v755
    %v774 = vmul.f32 %v759, %v756
    %v775 = vmul.f32 %v759, %v757
    %v776 = vadd.f32 %v692, %v760
    %v777 = vadd.f32 %v693, %v761
    %v778 = vadd.f32 %v694, %v762
    %v779 = vadd.f32 %v695, %v763
    %v780 = vadd.f32 %v696, %v764
    %v781 = vadd.f32 %v697, %v765
    %v782 = vadd.f32 %v698, %v766
    %v783 = vadd.f32 %v699, %v767
    %v784 = vadd.f32 %v700, %v768
    %v785 = vadd.f32 %v701, %v769
    %v786 = vadd.f32 %v702, %v770
    %v787 = vadd.f32 %v703, %v771
    %v788 = vadd.f32 %v704, %v772
    %v789 = vadd.f32 %v705, %v773
    %v790 = vadd.f32 %v706, %v774
    %v791 = vadd.f32 %v707, %v775
    %s792 = sld [smem:[#allocation7 + $0x83]]
    %v793 = vstv %s792
    %v794 = vmul.f32 %v793, %v742
    %v795 = vmul.f32 %v793, %v743
    %v796 = vmul.f32 %v793, %v744
    %v797 = vmul.f32 %v793, %v745
    %v798 = vmul.f32 %v793, %v746
    %v799 = vmul.f32 %v793, %v747
    %v800 = vmul.f32 %v793, %v748
    %v801 = vmul.f32 %v793, %v749
    %v802 = vmul.f32 %v793, %v750
    %v803 = vmul.f32 %v793, %v751
    %v804 = vmul.f32 %v793, %v752
    %v805 = vmul.f32 %v793, %v753
    %v806 = vmul.f32 %v793, %v754
    %v807 = vmul.f32 %v793, %v755
    %v808 = vmul.f32 %v793, %v756
    %v809 = vmul.f32 %v793, %v757
    %v810 = vadd.f32 %v726, %v794
    %v811 = vadd.f32 %v727, %v795
    %v812 = vadd.f32 %v728, %v796
    %v813 = vadd.f32 %v729, %v797
    %v814 = vadd.f32 %v730, %v798
    %v815 = vadd.f32 %v731, %v799
    %v816 = vadd.f32 %v732, %v800
    %v817 = vadd.f32 %v733, %v801
    %v818 = vadd.f32 %v734, %v802
    %v819 = vadd.f32 %v735, %v803
    %v820 = vadd.f32 %v736, %v804
    %v821 = vadd.f32 %v737, %v805
    %v822 = vadd.f32 %v738, %v806
    %v823 = vadd.f32 %v739, %v807
    %v824 = vadd.f32 %v740, %v808
    %v825 = vadd.f32 %v741, %v809
    %v826 = vpack.c.bf16 %v777, %v776
    %v827 = vpack.c.bf16 %v779, %v778
    %v828 = vpack.c.bf16 %v781, %v780
    %v829 = vpack.c.bf16 %v783, %v782
    %v830 = vpack.c.bf16 %v785, %v784
    %v831 = vpack.c.bf16 %v787, %v786
    %v832 = vpack.c.bf16 %v789, %v788
    %v833 = vpack.c.bf16 %v791, %v790
    %v842 = vunpack.c.l.b16 %v826
    %v843 = vunpack.c.h.b16 %v826
    %v844 = vunpack.c.l.b16 %v827
    %v845 = vunpack.c.h.b16 %v827
    %v846 = vunpack.c.l.b16 %v828
    %v847 = vunpack.c.h.b16 %v828
    %v848 = vunpack.c.l.b16 %v829
    %v849 = vunpack.c.h.b16 %v829
    %v850 = vunpack.c.l.b16 %v830
    %v851 = vunpack.c.h.b16 %v830
    %v852 = vunpack.c.l.b16 %v831
    %v853 = vunpack.c.h.b16 %v831
    %v854 = vunpack.c.l.b16 %v832
    %v855 = vunpack.c.h.b16 %v832
    %v856 = vunpack.c.l.b16 %v833
    %v857 = vunpack.c.h.b16 %v833
    %v858 = vpack.c.b16 %v842, %v842
    %v859 = vpack.c.b16 %v843, %v843
    %v860 = vpack.c.b16 %v844, %v844
    %v861 = vpack.c.b16 %v845, %v845
    %v862 = vpack.c.b16 %v846, %v846
    %v863 = vpack.c.b16 %v847, %v847
    %v864 = vpack.c.b16 %v848, %v848
    %v865 = vpack.c.b16 %v849, %v849
    %v866 = vpack.c.b16 %v850, %v850
    %v867 = vpack.c.b16 %v851, %v851
    %v868 = vpack.c.b16 %v852, %v852
    %v869 = vpack.c.b16 %v853, %v853
    %v870 = vpack.c.b16 %v854, %v854
    %v871 = vpack.c.b16 %v855, %v855
    %v872 = vpack.c.b16 %v856, %v856
    %v873 = vpack.c.b16 %v857, %v857
    %s890 = scalar_lea.vmem [#allocation9], 64
    %891 = vst [vmem:[%s890] sm:$0xf] %v858
    %892 = vst [vmem:[%s890 + $0x4] sm:$0xf] %v859
    %893 = vst [vmem:[%s890 + $0x8] sm:$0xf] %v860
    %894 = vst [vmem:[%s890 + $0xc] sm:$0xf] %v861
    %895 = vst [vmem:[%s890 + $0x10] sm:$0xf] %v862
    %896 = vst [vmem:[%s890 + $0x14] sm:$0xf] %v863
    %897 = vst [vmem:[%s890 + $0x18] sm:$0xf] %v864
    %898 = vst [vmem:[%s890 + $0x1c] sm:$0xf] %v865
    %899 = vst [vmem:[%s890 + $0x20] sm:$0xf] %v866
    %900 = vst [vmem:[%s890 + $0x24] sm:$0xf] %v867
    %901 = vst [vmem:[%s890 + $0x28] sm:$0xf] %v868
    %902 = vst [vmem:[%s890 + $0x2c] sm:$0xf] %v869
    %903 = vst [vmem:[%s890 + $0x30] sm:$0xf] %v870
    %904 = vst [vmem:[%s890 + $0x34] sm:$0xf] %v871
    %905 = vst [vmem:[%s890 + $0x38] sm:$0xf] %v872
    %906 = vst [vmem:[%s890 + $0x3c] sm:$0xf] %v873
    %v907 = vpack.c.bf16 %v811, %v810
    %v908 = vpack.c.bf16 %v813, %v812
    %v909 = vpack.c.bf16 %v815, %v814
    %v910 = vpack.c.bf16 %v817, %v816
    %v911 = vpack.c.bf16 %v819, %v818
    %v912 = vpack.c.bf16 %v821, %v820
    %v913 = vpack.c.bf16 %v823, %v822
    %v914 = vpack.c.bf16 %v825, %v824
    %v923 = vunpack.c.l.b16 %v907
    %v924 = vunpack.c.h.b16 %v907
    %v925 = vunpack.c.l.b16 %v908
    %v926 = vunpack.c.h.b16 %v908
    %v927 = vunpack.c.l.b16 %v909
    %v928 = vunpack.c.h.b16 %v909
    %v929 = vunpack.c.l.b16 %v910
    %v930 = vunpack.c.h.b16 %v910
    %v931 = vunpack.c.l.b16 %v911
    %v932 = vunpack.c.h.b16 %v911
    %v933 = vunpack.c.l.b16 %v912
    %v934 = vunpack.c.h.b16 %v912
    %v935 = vunpack.c.l.b16 %v913
    %v936 = vunpack.c.h.b16 %v913
    %v937 = vunpack.c.l.b16 %v914
    %v938 = vunpack.c.h.b16 %v914
    %v939 = vpack.c.b16 %v923, %v923
    %v940 = vpack.c.b16 %v924, %v924
    %v941 = vpack.c.b16 %v925, %v925
    %v942 = vpack.c.b16 %v926, %v926
    %v943 = vpack.c.b16 %v927, %v927
    %v944 = vpack.c.b16 %v928, %v928
    %v945 = vpack.c.b16 %v929, %v929
    %v946 = vpack.c.b16 %v930, %v930
    %v947 = vpack.c.b16 %v931, %v931
    %v948 = vpack.c.b16 %v932, %v932
    %v949 = vpack.c.b16 %v933, %v933
    %v950 = vpack.c.b16 %v934, %v934
    %v951 = vpack.c.b16 %v935, %v935
    %v952 = vpack.c.b16 %v936, %v936
    %v953 = vpack.c.b16 %v937, %v937
    %v954 = vpack.c.b16 %v938, %v938
    %s971 = scalar_lea.vmem [#allocation10], 64
    %972 = vst [vmem:[%s971] sm:$0xf] %v939
    %973 = vst [vmem:[%s971 + $0x4] sm:$0xf] %v940
    %974 = vst [vmem:[%s971 + $0x8] sm:$0xf] %v941
    %975 = vst [vmem:[%s971 + $0xc] sm:$0xf] %v942
    %976 = vst [vmem:[%s971 + $0x10] sm:$0xf] %v943
    %977 = vst [vmem:[%s971 + $0x14] sm:$0xf] %v944
    %978 = vst [vmem:[%s971 + $0x18] sm:$0xf] %v945
    %979 = vst [vmem:[%s971 + $0x1c] sm:$0xf] %v946
    %980 = vst [vmem:[%s971 + $0x20] sm:$0xf] %v947
    %981 = vst [vmem:[%s971 + $0x24] sm:$0xf] %v948
    %982 = vst [vmem:[%s971 + $0x28] sm:$0xf] %v949
    %983 = vst [vmem:[%s971 + $0x2c] sm:$0xf] %v950
    %984 = vst [vmem:[%s971 + $0x30] sm:$0xf] %v951
    %985 = vst [vmem:[%s971 + $0x34] sm:$0xf] %v952
    %986 = vst [vmem:[%s971 + $0x38] sm:$0xf] %v953
    %987 = vst [vmem:[%s971 + $0x3c] sm:$0xf] %v954
    // Predicated region
    $region26: #{tpu_custom_call.1} parent=1 // pred_check
      _
    $region27: #{tpu_custom_call.1} parent=1 // pred_check_branch
      %989 = sbr.rel (0) target = $region29
    $region28: #{tpu_custom_call.1} parent=1 // pred_region
      %s991 = ssub.s32 2048, 2048
      %992 = vsyncadd [#allocation4], %s991
      %s993 = sshll.u32 [#allocation9], 4
      %s994 = int_to_ptr.vmem [resolvable:$true] %s993
      %999 = dma.vmem_to_hbm [thread:$0]  %s994, 2048, %s3, [#allocation4], 64, 64, 4
    $region29: #{tpu_custom_call.1} parent=1 // pred_fallthru
      _
    // Predicated region
    $region30: #{tpu_custom_call.1} parent=1 // pred_check
      _
    $region31: #{tpu_custom_call.1} parent=1 // pred_check_branch
      %1001 = sbr.rel (0) target = $region33
    $region32: #{tpu_custom_call.1} parent=1 // pred_region
      %s1003 = ssub.s32 2048, 2048
      %1004 = vsyncadd [#allocation11], %s1003
      %s1005 = sshll.u32 [#allocation10], 4
      %s1006 = int_to_ptr.vmem [resolvable:$true] %s1005
      %1011 = dma.vmem_to_hbm [thread:$0]  %s1006, 2048, %s4, [#allocation11], 64, 64, 4
    $region33: #{tpu_custom_call.1} parent=1 // pred_fallthru
      _
    // Predicated region
    $region34: #{tpu_custom_call.1} parent=1 // pred_check
      _
    $region35: #{tpu_custom_call.1} parent=1 // pred_check_branch
      %1013 = sbr.rel (0) target = $region37
    $region36: #{tpu_custom_call.1} parent=1 // pred_region
      %1014 = dma.done [#allocation4], 2048
    $region37: #{tpu_custom_call.1} parent=1 // pred_fallthru
      _
    // Predicated region
    $region38: #{tpu_custom_call.1} parent=1 // pred_check
      _
    $region39: #{tpu_custom_call.1} parent=1 // pred_check_branch
      %1016 = sbr.rel (0) target = $region41
    $region40: #{tpu_custom_call.1} parent=1 // pred_region
      %1017 = dma.done [#allocation11], 2048
    $region41: #{tpu_custom_call.1} parent=1 // pred_fallthru
      _
    %1018 = vsyncpa [#allocation3], 1
    %1019 = vsyncpa [#allocation4], 1
    %1020 = vsyncpa [#allocation11], 1
    %1021 = vsyncpa [#allocation5], 1
    %1022 = vsyncpa [#allocation6], 1

</llo_original>
